<compile_context>
chip_gen: v7x
topology: tpu7x:2x2x1
jax: 0.10.0
libtpu: 0.0.40
codegen_flags: <defaults>
</compile_context>

<pallas_src>
import math

import jax
import jax.numpy as jnp
from jax.experimental import pallas as pl
from jax.experimental.pallas import tpu as pltpu


def _round_up(x: int, n: int) -> int:
    return ((x + n - 1) // n) * n


def _vmem_budget_bytes() -> int:
    """Per-TensorCore VMEM budget we allow the kernel to claim."""
    try:
        kind = jax.devices()[0].device_kind.lower()
    except Exception:
        kind = ""
    if "v7" in kind:
        return 52 * 2**20   # 64 MiB/TC physical on v7x: leave compiler-scratch headroom
    return 96 * 2**20       # v5e / v6e: 128 MiB physical VMEM


# ---------------------------------------------------------------------------
# Kernels
# ---------------------------------------------------------------------------

def _matmul_kernel_f32(x_ref, w_ref, o_ref):
    """f32 output: accumulate directly into the resident output tile (no scratch)."""
    k = pl.program_id(2)
    prod = jnp.dot(x_ref[...], w_ref[...], preferred_element_type=jnp.float32)

    @pl.when(k == 0)
    def _():
        o_ref[...] = prod           # fused zero-init: first K step just writes

    @pl.when(k > 0)
    def _():
        o_ref[...] += prod


def _matmul_kernel_acc(x_ref, w_ref, o_ref, acc_ref):
    """Non-f32 output: keep partial sums in an f32 VMEM scratch, cast once at the end."""
    k = pl.program_id(2)
    prod = jnp.dot(x_ref[...], w_ref[...], preferred_element_type=jnp.float32)

    @pl.when(k == 0)
    def _():
        acc_ref[...] = prod

    @pl.when(k > 0)
    def _():
        acc_ref[...] += prod

    @pl.when(k == pl.num_programs(2) - 1)
    def _():
        o_ref[...] = acc_ref[...].astype(o_ref.dtype)


# ---------------------------------------------------------------------------
# Host-side wrappers
# ---------------------------------------------------------------------------

def prepare_linear_weight(weight: jax.Array) -> jax.Array:
    """One-time per-parameter preprocessing (hoisted out of the forward path).

    Transposes (d_out, d_in) -> (d_in, d_out) so the MXU sees a canonical (K, N) RHS,
    and zero-pads K to a multiple of 128 when d_in >= 128 is ragged (zeros are exact
    for the contraction).
    """
    d_out, d_in = weight.shape
    w_t = jnp.transpose(weight)                       # (d_in, d_out)
    if d_in >= 128 and d_in % 128 != 0:
        w_t = jnp.pad(w_t, ((0, _round_up(d_in, 128) - d_in), (0, 0)))
    return w_t


def linear_apply(x: jax.Array, w_t: jax.Array, *,
                 tile_m: int = 512, tile_n: int = 512, tile_k: int = 1024) -> jax.Array:
    """y = einsum('oi,...i->...o', weight, x) with w_t = prepare_linear_weight(weight)."""
    k_pad, d_out = w_t.shape
    orig_shape = x.shape
    d_in = orig_shape[-1]
    assert d_in <= k_pad, "x feature dim incompatible with prepared weight"

    m = int(math.prod(orig_shape[:-1])) if len(orig_shape) > 1 else 1
    x2d = x.reshape(m, d_in)
    if d_in != k_pad:
        # Ragged contraction dim: zero-pad K once (weight's padded K rows are zero).
        x2d = jnp.pad(x2d, ((0, 0), (0, k_pad - d_in)))

    out_dtype = x.dtype
    xb = jnp.dtype(x2d.dtype).itemsize
    wb = jnp.dtype(w_t.dtype).itemsize
    ob = jnp.dtype(out_dtype).itemsize

    # ---- K tiling: k_pad is either < 128 (single block) or a multiple of 128.
    if k_pad % 128 == 0:
        tk = min(_round_up(tile_k, 128), k_pad)
        while k_pad % tk != 0:        # keep tk an exact divisor (no garbage in the sum)
            tk -= 128
    else:
        tk = k_pad                    # small ragged d_in: one K block spanning it all

    # ---- N tiling: no shrink-to-divide; ragged last tile handled by cdiv + masked vst.
    if d_out < 128:
        tn = d_out
    else:
        tn = min(_round_up(tile_n, 128), _round_up(d_out, 128))

    # ---- M tiling: dtype-aware sublane multiple; ragged last tile masked on store.
    sub = max(8, 32 // xb)            # 8 f32 / 16 bf16 / 32 int8
    tm = _round_up(min(tile_m, _round_up(m, sub)), sub)

    needs_scratch = out_dtype != jnp.float32
    budget = _vmem_budget_bytes()

    def footprint(tm_, tn_, tk_):
        f = 2 * tm_ * tk_ * xb + 2 * tk_ * tn_ * wb + 2 * tm_ * tn_ * ob
        if needs_scratch:
            f += tm_ * tn_ * 4
        return f

    # Clamp tiles if a (caller-supplied) config would exceed the per-core VMEM budget.
    while footprint(tm, tn, tk) > budget:
        if tk >= 256 and (tk // 2) % 128 == 0 and k_pad % (tk // 2) == 0:
            tk //= 2
        elif tn > 128:
            tn = max(128, _round_up(tn // 2, 128))
        elif tm > sub:
            tm = max(sub, _round_up(tm // 2, sub))
        else:
            break

    grid = (pl.cdiv(m, tm), pl.cdiv(d_out, tn), k_pad // tk)

    vmem_limit = int(min(budget, max(32 * 2**20, 2 * footprint(tm, tn, tk))))

    cost = pl.CostEstimate(
        flops=2 * m * d_in * d_out,
        transcendentals=0,
        bytes_accessed=m * d_in * xb + k_pad * d_out * wb + m * d_out * ob,
    )

    kernel = _matmul_kernel_acc if needs_scratch else _matmul_kernel_f32
    scratch = [pltpu.VMEM((tm, tn), jnp.float32)] if needs_scratch else []

    # TODO(synk): if profiling shows exposed weight DMA at small M (decode), add
    # pipeline_mode=pl.Buffered(3) on the weight BlockSpec (re-check VMEM on v7x).
    out = pl.pallas_call(
        kernel,
        out_shape=jax.ShapeDtypeStruct((m, d_out), out_dtype),
        grid_spec=pltpu.PrefetchScalarGridSpec(
            num_scalar_prefetch=0,
            grid=grid,
            in_specs=[
                pl.BlockSpec((tm, tk), lambda i, j, k: (i, k)),   # activation tile
                pl.BlockSpec((tk, tn), lambda i, j, k: (k, j)),   # weight^T tile (K, N)
            ],
            out_specs=pl.BlockSpec((tm, tn), lambda i, j, k: (i, j)),
            scratch_shapes=scratch,
        ),
        compiler_params=pltpu.CompilerParams(
            dimension_semantics=("parallel", "parallel", "arbitrary"),
            vmem_limit_bytes=vmem_limit,
        ),
        cost_estimate=cost,
    )(x2d, w_t)

    return out.reshape(*orig_shape[:-1], d_out)


def linear(x: jax.Array, weight: jax.Array, **tile_kwargs) -> jax.Array:
    """Convenience one-shot API (weight (d_out, d_in)). For repeated forward calls,
    prepare the weight once with prepare_linear_weight() and use linear_apply()."""
    return linear_apply(x, prepare_linear_weight(weight), **tile_kwargs)


def init_linear_weight(key, in_features: int, out_features: int, dtype=jnp.float32):
    # Matches nn.init.trunc_normal_(mean=0, std=std, a=-3*std, b=3*std)
    std = math.sqrt(2.0 / (in_features + out_features))
    w = jax.random.truncated_normal(
        key, lower=-3.0, upper=3.0,
        shape=(out_features, in_features), dtype=jnp.float32,
    ) * std
    return w.astype(dtype)


if __name__ == "__main__":
    key = jax.random.PRNGKey(0)
    kx, kw = jax.random.split(key)

    batch, seq, d_in, d_out = 2, 8, 32, 64
    x = jax.random.normal(kx, (batch, seq, d_in), dtype=jnp.float32)
    weight = init_linear_weight(kw, d_in, d_out)

    # Hoist the weight transpose/pad out of the forward path (done once, like at init).
    w_t = prepare_linear_weight(weight)
    fwd = jax.jit(lambda xx: linear_apply(xx, w_t))

    y = jax.block_until_ready(fwd(x))

    # Reference check against plain JAX einsum (same contraction as the PyTorch module).
    y_ref = jnp.einsum("oi,...i->...o", weight, x,
                       preferred_element_type=jnp.float32,
                       precision=jax.lax.Precision.HIGHEST)
    assert y.shape == (batch, seq, d_out)
    assert jnp.allclose(y, y_ref, atol=1e-4, rtol=1e-4), "mismatch vs reference"

    print("KERNEL_OK")
</pallas_src>

<mosaic_0001>
module attributes {stable_mosaic.version = 11 : i64} {
  func.func @_matmul_kernel_f32(%arg0: i32, %arg1: i32, %arg2: i32, %arg3: memref<16x32xf32, #tpu.memory_space<vmem>>, %arg4: memref<32x64xf32, #tpu.memory_space<vmem>>, %arg5: memref<16x64xf32, #tpu.memory_space<vmem>>) attributes {dimension_semantics = [#tpu.dimension_semantics<parallel>, #tpu.dimension_semantics<parallel>, #tpu.dimension_semantics<arbitrary>], iteration_bounds = array<i64: 1, 1, 1>, scalar_prefetch = 0 : i64, scratch_operands = 0 : i64, tpu.core_type = #tpu.core_type<tc>, window_params = [{transform_indices = @transform_0, window_bounds = array<i64: 16, 32>}, {transform_indices = @transform_1, window_bounds = array<i64: 32, 64>}, {transform_indices = @transform_2, window_bounds = array<i64: 16, 64>}]} {
    %c0 = arith.constant 0 : index
    %c0_0 = arith.constant 0 : index
    %0 = vector.load %arg3[%c0, %c0_0] : memref<16x32xf32, #tpu.memory_space<vmem>>, vector<16x32xf32>
    %c0_1 = arith.constant 0 : index
    %c0_2 = arith.constant 0 : index
    %1 = vector.load %arg4[%c0_1, %c0_2] : memref<32x64xf32, #tpu.memory_space<vmem>>, vector<32x64xf32>
    %cst = arith.constant dense<0.000000e+00> : vector<16x64xf32>
    %2 = tpu.matmul %0, %1, %cst {dimension_numbers = #tpu.dot_dimension_numbers<[1], [0], [0], [1], [0, 0, 1, 1], [], []>} : vector<16x32xf32>, vector<32x64xf32>, vector<16x64xf32> -> vector<16x64xf32>
    %c0_i32 = arith.constant 0 : i32
    %3 = arith.cmpi eq, %arg2, %c0_i32 : i32
    %4 = arith.extui %3 : i1 to i32
    %c0_i32_3 = arith.constant 0 : i32
    %5 = arith.cmpi ne, %4, %c0_i32_3 : i32
    scf.if %5 {
      %c0_6 = arith.constant 0 : index
      %c0_7 = arith.constant 0 : index
      %9 = vector.load %arg5[%c0_6, %c0_7] : memref<16x64xf32, #tpu.memory_space<vmem>>, vector<16x64xf32>
      tpu.vector_store %arg5[%c0_6, %c0_7], %2 {strides = array<i32>} : memref<16x64xf32, #tpu.memory_space<vmem>>, vector<16x64xf32>,
    } else {
    }
    %c0_i32_4 = arith.constant 0 : i32
    %6 = arith.cmpi sgt, %arg2, %c0_i32_4 : i32
    %7 = arith.extui %6 : i1 to i32
    %c0_i32_5 = arith.constant 0 : i32
    %8 = arith.cmpi ne, %7, %c0_i32_5 : i32
    scf.if %8 {
      %c0_6 = arith.constant 0 : index
      %c0_7 = arith.constant 0 : index
      %9 = vector.load %arg5[%c0_6, %c0_7] : memref<16x64xf32, #tpu.memory_space<vmem>>, vector<16x64xf32>
      %10 = arith.addf %9, %2 : vector<16x64xf32>
      %c0_8 = arith.constant 0 : index
      %c0_9 = arith.constant 0 : index
      %11 = vector.load %arg5[%c0_8, %c0_9] : memref<16x64xf32, #tpu.memory_space<vmem>>, vector<16x64xf32>
      tpu.vector_store %arg5[%c0_8, %c0_9], %10 {strides = array<i32>} : memref<16x64xf32, #tpu.memory_space<vmem>>, vector<16x64xf32>,
    } else {
    }
    return
  }
  func.func @transform_0(%arg0: i32, %arg1: i32, %arg2: i32) -> (i32, i32) {
    %c0_i32 = arith.constant 0 : i32
    return %arg0, %arg2 : i32, i32
  }
  func.func @transform_1(%arg0: i32, %arg1: i32, %arg2: i32) -> (i32, i32) {
    %c0_i32 = arith.constant 0 : i32
    return %arg2, %arg1 : i32, i32
  }
  func.func @transform_2(%arg0: i32, %arg1: i32, %arg2: i32) -> (i32, i32) {
    %c0_i32 = arith.constant 0 : i32
    return %arg0, %arg1 : i32, i32
  }
}

</mosaic_0001>

<llo_original>
// kernel: _lambda_.1
$region0: #{_lambda_.1}
  #allocation0 [shape = 'u32[]', space=smem, size = 0x4, offset = 0x4, fixed_abs, tag = 'smem constant byte address 0x4 - core index']
  #allocation1 [shape = 'u32[144,128]{1,0:T(1,128)}', space=vmem, size = 0x12000, scoped, tag = 'internal scratch']
  %s0 = inlined_call_operand.hbm [shape: f32[16,32], index: 0, kind: input, shape index: {}]
  %s1 = inlined_call_operand.hbm [shape: f32[32,64], index: 1, kind: input, shape index: {}]
  %s2 = inlined_call_operand.hbm [shape: f32[16,64], index: 2, kind: output, shape index: {}]
  %s3 = sld [smem:[#allocation0]]
  $region34: #{_lambda_.1} parent=0
    _
  %s5 = ssub.s32 1, %s3
  %s6 = scalar_select 0, %s5, %s3
  $region1: #{_lambda_.1} parent=0
    #allocation2 [shape = 'u8[8192]{0}', space=vmem, size = 0x2000, scoped, tag = 'input window, operand 0, single buffered']
    #allocation3 [shape = 's32[1]{0}', space=sflag, size = 0x4, scoped, tag = 'scoped memory for _lambda_.1']
    #allocation4 [shape = 's32[1]{0}', space=sflag, size = 0x4, scoped, tag = 'scoped memory for _lambda_.1']
    #allocation5 [shape = 'u8[16384]{0}', space=vmem, size = 0x4000, scoped, tag = 'input window, operand 1, single buffered']
    #allocation6 [shape = 's32[1]{0}', space=sflag, size = 0x4, scoped, tag = 'scoped memory for _lambda_.1']
    #allocation7 [shape = 'u8[8192]{0}', space=vmem, size = 0x2000, scoped, tag = 'output window, operand 0, single buffered']
    %7 = vsyncpa [#allocation3], 0
    %8 = vsyncpa [#allocation6], 0
    %9 = vsyncpa [#allocation4], 0
    // Predicated region
    $region2: #{_lambda_.1} parent=1 // pred_check
      _
    $region3: #{_lambda_.1} parent=1 // pred_check_branch
      %11 = sbr.rel (0) target = $region5
    $region4: #{_lambda_.1} parent=1 // pred_region
      %s13 = ssub.s32 256, 256
      %14 = vsyncadd [#allocation3], %s13
      %s15 = sshll.u32 [#allocation2], 4
      %s16 = int_to_ptr.vmem [resolvable:$true] %s15
      %21 = dma.hbm_to_vmem [thread:$0]  %s0, 256, %s16, [#allocation3], 128, 128, 8
    $region5: #{_lambda_.1} parent=1 // pred_fallthru
      _
    // Predicated region
    $region6: #{_lambda_.1} parent=1 // pred_check
      _
    $region7: #{_lambda_.1} parent=1 // pred_check_branch
      %23 = sbr.rel (0) target = $region9
    $region8: #{_lambda_.1} parent=1 // pred_region
      %s25 = ssub.s32 512, 512
      %26 = vsyncadd [#allocation6], %s25
      %s27 = sshll.u32 [#allocation5], 4
      %s28 = int_to_ptr.vmem [resolvable:$true] %s27
      %33 = dma.hbm_to_vmem [thread:$0]  %s1, 512, %s28, [#allocation6], 128, 128, 8
    $region9: #{_lambda_.1} parent=1 // pred_fallthru
      _
    // Predicated region
    $region10: #{_lambda_.1} parent=1 // pred_check
      _
    $region11: #{_lambda_.1} parent=1 // pred_check_branch
      %35 = sbr.rel (0) target = $region13
    $region12: #{_lambda_.1} parent=1 // pred_region
      %36 = dma.done [#allocation3], 256
    $region13: #{_lambda_.1} parent=1 // pred_fallthru
      _
    // Predicated region
    $region14: #{_lambda_.1} parent=1 // pred_check
      _
    $region15: #{_lambda_.1} parent=1 // pred_check_branch
      %38 = sbr.rel (0) target = $region17
    $region16: #{_lambda_.1} parent=1 // pred_region
      %39 = dma.done [#allocation6], 512
    $region17: #{_lambda_.1} parent=1 // pred_fallthru
      _
    %v40 = vld [vmem:[#allocation2] sm:$0xff]
    %v41 = vld [vmem:[#allocation2 + $0x8] sm:$0xff]
    %v42 = vld [vmem:[#allocation5] sm:$0xff]
    %v43 = vld [vmem:[#allocation5 + $0x8] sm:$0xff]
    %v44 = vld [vmem:[#allocation5 + $0x10] sm:$0xff]
    %v45 = vld [vmem:[#allocation5 + $0x18] sm:$0xff]
    %vm46 = vcmask 261120
    %v48 = vsel %vm46, %v40, 0
    %v51 = vsel %vm46, %v41, 0
    %53 = vmatprep.subr.mxu0 0.0
    %54 = vmatpush1.msra.mxu0 %v42
    %55 = vmatprep.subr.mxu0 0.0
    %56 = vmatpush1.msra.mxu0 %v43
    %57 = vmatprep.subr.mxu0 0.0
    %58 = vmatpush1.msra.mxu0 %v44
    %59 = vmatprep.subr.mxu0 0.0
    %60 = vmatpush1.msra.mxu0 %v45
    %61 = vmatprep.subr.mxu0 0.0
    %62 = vmatpush1.msra.mxu0 0.0
    %63 = vmatprep.subr.mxu0 0.0
    %64 = vmatpush1.msra.mxu0 0.0
    %65 = vmatprep.subr.mxu0 0.0
    %66 = vmatpush1.msra.mxu0 0.0
    %67 = vmatprep.subr.mxu0 0.0
    %68 = vmatpush1.msra.mxu0 0.0
    %69 = vmatprep.subr.mxu0 0.0
    %70 = vmatpush1.msra.mxu0 0.0
    %71 = vmatprep.subr.mxu0 0.0
    %72 = vmatpush1.msra.mxu0 0.0
    %73 = vmatprep.subr.mxu0 0.0
    %74 = vmatpush1.msra.mxu0 0.0
    %75 = vmatprep.subr.mxu0 0.0
    %76 = vmatpush1.msra.mxu0 0.0
    %77 = vmatprep.subr.mxu0 0.0
    %78 = vmatpush1.msra.mxu0 0.0
    %79 = vmatprep.subr.mxu0 0.0
    %80 = vmatpush1.msra.mxu0 0.0
    %81 = vmatprep.subr.mxu0 0.0
    %82 = vmatpush1.msra.mxu0 0.0
    %83 = vmatprep.subr.mxu0 0.0
    %84 = vmatpush1.msra.mxu0 0.0
    %85 = vmatprep.subr.mxu0 0.0
    %86 = vmatpush1.msra.mxu0 0.0
    %87 = vmatprep.subr.mxu0 0.0
    %88 = vmatpush1.msra.mxu0 0.0
    %89 = vmatprep.subr.mxu0 0.0
    %90 = vmatpush1.msra.mxu0 0.0
    %91 = vmatprep.subr.mxu0 0.0
    %92 = vmatpush1.msra.mxu0 0.0
    %93 = vmatprep.subr.mxu0 0.0
    %94 = vmatpush1.msra.mxu0 0.0
    %95 = vmatprep.subr.mxu0 0.0
    %96 = vmatpush1.msra.mxu0 0.0
    %97 = vmatprep.subr.mxu0 0.0
    %98 = vmatpush1.msra.mxu0 0.0
    %99 = vmatprep.subr.mxu0 0.0
    %100 = vmatpush1.msra.mxu0 0.0
    %101 = vmatprep.subr.mxu0 0.0
    %102 = vmatpush1.msra.mxu0 0.0
    %103 = vmatprep.subr.mxu0 0.0
    %104 = vmatpush1.msra.mxu0 0.0
    %105 = vmatprep.subr.mxu0 0.0
    %106 = vmatpush1.msra.mxu0 0.0
    %107 = vmatprep.subr.mxu0 0.0
    %108 = vmatpush1.msra.mxu0 0.0
    %109 = vmatprep.subr.mxu0 0.0
    %110 = vmatpush1.msra.mxu0 0.0
    %111 = vmatprep.subr.mxu0 0.0
    %112 = vmatpush1.msra.mxu0 0.0
    %113 = vmatprep.subr.mxu0 0.0
    %114 = vmatpush1.msra.mxu0 0.0
    %115 = vmatprep.subr.mxu0 0.0
    %116 = vmatpush1.msra.mxu0 0.0
    %117 = vmatprep.mubr.f32.mxu0 0.0
    %118 = vmatmul.mubr.f32.gmra.mrb[0].mxu0 %v48
    %v119 = vpop.f32.mrb[0].mxu0
    %v120 = vadd.f32 0.0, %v119
    %v121 = vpop.f32.mrb[0].mxu0
    %122 = vmatprep.mubr.f32.mxu0 0.0
    %123 = vmatmul.mubr.f32.gmra.mrb[0].mxu0 %v51
    %v124 = vpop.f32.mrb[0].mxu0
    %v125 = vadd.f32 0.0, %v124
    %v126 = vpop.f32.mrb[0].mxu0
    %127 = vdwg.mxu0
    %p128 = scmp.eq.s32.totalorder 0, 0
    // Predicated region
    $region18: #{_lambda_.1} parent=1 // pred_check
      %p129 = pneg %p128
    $region19: #{_lambda_.1} parent=1 // pred_check_branch
      %131 = sbr.rel (%p129) target = $region21
    $region20: #{_lambda_.1} parent=1 // pred_region
      %vm132 = vcmask 523264
      %133 = vst.msk [vmem:[#allocation7] sm:$0xff] %vm132, %v120
      %134 = vst.msk [vmem:[#allocation7 + $0x8] sm:$0xff] %vm132, %v125
    $region21: #{_lambda_.1} parent=1 // pred_fallthru
      _
    %p135 = scmp.gt.s32.totalorder 0, 0
    // Predicated region
    $region22: #{_lambda_.1} parent=1 // pred_check
      %p136 = pneg %p135
    $region23: #{_lambda_.1} parent=1 // pred_check_branch
      %138 = sbr.rel (%p136) target = $region25
    $region24: #{_lambda_.1} parent=1 // pred_region
      %v139 = vld [vmem:[#allocation7] sm:$0xff]
      %v140 = vld [vmem:[#allocation7 + $0x8] sm:$0xff]
      %v141 = vadd.f32 %v139, %v120
      %v142 = vadd.f32 %v140, %v125
      %vm143 = vcmask 523264
      %144 = vst.msk [vmem:[#allocation7] sm:$0xff] %vm143, %v141
      %145 = vst.msk [vmem:[#allocation7 + $0x8] sm:$0xff] %vm143, %v142
    $region25: #{_lambda_.1} parent=1 // pred_fallthru
      _
    // Predicated region
    $region26: #{_lambda_.1} parent=1 // pred_check
      _
    $region27: #{_lambda_.1} parent=1 // pred_check_branch
      %147 = sbr.rel (0) target = $region29
    $region28: #{_lambda_.1} parent=1 // pred_region
      %s149 = ssub.s32 256, 256
      %150 = vsyncadd [#allocation4], %s149
      %s151 = sshll.u32 [#allocation7], 4
      %s152 = int_to_ptr.vmem [resolvable:$true] %s151
      %157 = dma.vmem_to_hbm [thread:$0]  %s152, 256, %s2, [#allocation4], 128, 128, 8
    $region29: #{_lambda_.1} parent=1 // pred_fallthru
      _
    // Predicated region
    $region30: #{_lambda_.1} parent=1 // pred_check
      _
    $region31: #{_lambda_.1} parent=1 // pred_check_branch
      %159 = sbr.rel (0) target = $region33
    $region32: #{_lambda_.1} parent=1 // pred_region
      %160 = dma.done [#allocation4], 256
    $region33: #{_lambda_.1} parent=1 // pred_fallthru
      _
    %161 = vsyncpa [#allocation3], 1
    %162 = vsyncpa [#allocation6], 1
    %163 = vsyncpa [#allocation4], 1

</llo_original>
